<compile_context>
chip_gen: v6e
topology: v6e:2x2x1
jax: 0.10.0
libtpu: 0.0.40
codegen_flags: <defaults>
</compile_context>

<pallas_src>
import functools
import math

import jax
import jax.numpy as jnp
from jax.experimental import pallas as pl
from jax.experimental.pallas import tpu as pltpu

_LANE = 128
_SUBLANE = 8


def _cdiv(a, b):
    return -(-a // b)


def _round_up(x, m):
    return _cdiv(x, m) * m


def _tpu_budgets():
    """Generation-aware (per-step input byte target, scoped-VMEM limit)."""
    cap = 64 * 1024 * 1024                      # conservative default (v7x-sized)
    try:
        info = pltpu.get_tpu_info()
        cap = int(getattr(info, "vmem_capacity_bytes", cap))
    except Exception:
        pass
    if cap >= 100 * 1024 * 1024:                # v5e / v6e: 128 MiB physical VMEM
        target = 12 * 1024 * 1024
    else:                                       # v7x: 64 MiB physical VMEM
        target = 8 * 1024 * 1024
    # Worst case per call: <=2 inputs double-buffered (2x target) + f32 upcast /
    # elementwise temporaries (~2x target) + small (8, C) partial blocks.  That
    # fits under the limits below with headroom left for the runtime.
    limit = int(min(cap - 12 * 1024 * 1024, 100 * 1024 * 1024))
    limit = max(limit, 32 * 1024 * 1024)
    return target, limit


_TARGET_BLOCK_BYTES, _VMEM_LIMIT_BYTES = _tpu_budgets()


def _sublane_multiple(*dtypes):
    """Packed sublane row multiple: 8 (32-bit), 16 (bf16/f16), 32 (8-bit)."""
    m = _SUBLANE
    for dt in dtypes:
        m = max(m, 32 // max(jnp.dtype(dt).itemsize, 1))
    return m


def _pick_tm(rows, bytes_per_row, row_mult, override=None):
    """Largest row tile (multiple of row_mult) within the per-step byte budget."""
    if override is not None:
        tm = int(override)
    else:
        tm = _TARGET_BLOCK_BYTES // max(int(bytes_per_row), 1)
    tm = min(tm, _round_up(int(rows), row_mult))
    tm = max(row_mult, (tm // row_mult) * row_mult)
    return int(tm)


def _chunked_row_grid(rows, tm):
    """Split row blocks into (up to) 2 chunks for the megacore 'parallel' axis."""
    nblocks = _cdiv(rows, tm)
    nchunks = 2 if nblocks >= 2 else 1
    bpc = _cdiv(nblocks, nchunks)
    ragged = nchunks * bpc * tm > rows          # partial and/or phantom blocks
    return nchunks, bpc, nblocks, ragged


def _row_block_map(bpc, nblocks):
    last = nblocks - 1

    def index_map(c, i):
        # Phantom blocks of the chunked grid are clamped onto a real block;
        # the in-kernel mask zeroes their contribution.
        return (jnp.minimum(c * bpc + i, last), 0)

    return index_map


def _masked_accumulate(out_ref, x, *, tm, n_cols, rows, bpc, ragged):
    """Sublane-fold x (tm, n_cols) into the (8, n_cols) resident output block.

    Full blocks take the unmasked path; only blocks touching / past the row
    boundary (plus phantom blocks) pay for iota/compare/where.  The mask is
    applied right after the nonlinear op, so Inf/NaN from out-of-bounds rows
    never reaches the accumulator.
    """
    c = pl.program_id(0)
    i = pl.program_id(1)

    def _accum(v):
        # Pure-VALU sublane fold: (tm, C) -> (tm/8, 8, C) -> (8, C).
        out_ref[...] += v.reshape(tm // _SUBLANE, _SUBLANE, n_cols).sum(axis=0)

    if not ragged:
        _accum(x)
        return

    row0 = (c * bpc + i) * tm                   # first global row of this block
    is_full = row0 + tm <= rows

    @pl.when(is_full)
    def _():
        _accum(x)

    @pl.when(jnp.logical_not(is_full))
    def _():
        row_ids = jax.lax.broadcasted_iota(jnp.int32, (tm, 1), 0)
        _accum(jnp.where(row_ids < (rows - row0), x, 0.0))


# ----------------------------------------------------------------------------
# Kernel 1: column sums of (ori_w - w_hat)^2.
#   Output: (nchunks*8, N) f32 partials; the scalar reduce and the exact I^2
#   weighting (sum((d*I)^2) == sum(colsum(d^2) * I^2)) happen in JAX.
# ----------------------------------------------------------------------------
def _rd_kernel(w_ref, what_ref, out_ref, *, tm, n_cols, m_rows, bpc, ragged):
    @pl.when(pl.program_id(1) == 0)
    def _():
        out_ref[...] = jnp.zeros_like(out_ref)

    d = w_ref[...].astype(jnp.float32) - what_ref[...].astype(jnp.float32)
    _masked_accumulate(out_ref, d * d, tm=tm, n_cols=n_cols, rows=m_rows,
                       bpc=bpc, ragged=ragged)


def _distortion_column_sums(ori_w, w_hat, *, block_rows=None):
    M, N = ori_w.shape
    row_mult = _sublane_multiple(ori_w.dtype, w_hat.dtype)
    bytes_per_row = N * (ori_w.dtype.itemsize + w_hat.dtype.itemsize)
    tm = _pick_tm(M, bytes_per_row, row_mult, override=block_rows)
    nchunks, bpc, nblocks, ragged = _chunked_row_grid(M, tm)
    row_map = _row_block_map(bpc, nblocks)

    kernel = functools.partial(_rd_kernel, tm=tm, n_cols=N, m_rows=M,
                               bpc=bpc, ragged=ragged)
    parts = pl.pallas_call(
        kernel,
        out_shape=jax.ShapeDtypeStruct((nchunks * _SUBLANE, N), jnp.float32),
        grid_spec=pltpu.PrefetchScalarGridSpec(
            num_scalar_prefetch=0,
            grid=(nchunks, bpc),
            in_specs=[pl.BlockSpec((tm, N), row_map),
                      pl.BlockSpec((tm, N), row_map)],
            out_specs=pl.BlockSpec((_SUBLANE, N), lambda c, i: (c, 0)),
        ),
        compiler_params=pltpu.CompilerParams(
            dimension_semantics=("parallel", "arbitrary"),
            vmem_limit_bytes=_VMEM_LIMIT_BYTES),
    )(ori_w, w_hat)
    return parts                                # (nchunks*8, N) f32


# ----------------------------------------------------------------------------
# Kernel 2: sum(log(x)) over a copy-free, lane-dense 2-D view of one tensor.
# ----------------------------------------------------------------------------
def _logsum_kernel(x_ref, out_ref, *, tm, n_cols, n_rows, bpc, ragged):
    @pl.when(pl.program_id(1) == 0)
    def _():
        out_ref[...] = jnp.zeros_like(out_ref)

    v = jnp.log(x_ref[...].astype(jnp.float32))   # EUP
    _masked_accumulate(out_ref, v, tm=tm, n_cols=n_cols, rows=n_rows,
                       bpc=bpc, ragged=ragged)


def _lane_dense_view(t):
    """Copy-free 2-D view of t: widest slab width dividing its size, else the
    native trailing dim (block = full array dim, so no lane padding needed)."""
    total = int(t.size)
    for w in (8 * _LANE, 4 * _LANE, 2 * _LANE, _LANE):
        if total % w == 0:
            return t.reshape(total // w, w)
    if t.ndim >= 2:
        return t.reshape(total // t.shape[-1], t.shape[-1])
    # TODO(synk): for huge 1-D tensors whose length is not a multiple of 128,
    # tile the lane dimension instead of using one full-width row block.
    return t.reshape(1, total)


def _log_sum_tensor(t, *, block_rows=None):
    """sum(log(t)) via one pallas_call directly on t (no concat/pad copies)."""
    if t.size == 0:
        return jnp.zeros((), jnp.float32)
    x2d = _lane_dense_view(t)
    R, C = x2d.shape
    row_mult = _sublane_multiple(x2d.dtype)
    tm = _pick_tm(R, C * x2d.dtype.itemsize, row_mult, override=block_rows)
    nchunks, bpc, nblocks, ragged = _chunked_row_grid(R, tm)
    row_map = _row_block_map(bpc, nblocks)

    kernel = functools.partial(_logsum_kernel, tm=tm, n_cols=C, n_rows=R,
                               bpc=bpc, ragged=ragged)
    parts = pl.pallas_call(
        kernel,
        out_shape=jax.ShapeDtypeStruct((nchunks * _SUBLANE, C), jnp.float32),
        grid_spec=pltpu.PrefetchScalarGridSpec(
            num_scalar_prefetch=0,
            grid=(nchunks, bpc),
            in_specs=[pl.BlockSpec((tm, C), row_map)],
            out_specs=pl.BlockSpec((_SUBLANE, C), lambda c, i: (c, 0)),
        ),
        compiler_params=pltpu.CompilerParams(
            dimension_semantics=("parallel", "arbitrary"),
            vmem_limit_bytes=_VMEM_LIMIT_BYTES),
    )(x2d)
    return jnp.sum(parts)


# ----------------------------------------------------------------------------
# Module equivalent
# ----------------------------------------------------------------------------
class RateDistortionLossPallas:
    def __init__(self, std, Hr, lmbda):
        self.std = float(std)
        self.lmbda = float(lmbda)
        log_I = jnp.log(jnp.diag(Hr).astype(jnp.float32) + 1e-6)
        min_val = jnp.min(log_I)
        max_val = jnp.max(log_I)
        # matches torch: (log_I - min) / (max - min + 1e-8)  -> shape (N,)
        self.I = ((log_I - min_val) / (max_val - min_val + 1e-8)
                  ).astype(jnp.float32)
        self.I2 = self.I * self.I          # applied once, on column-folded sums

    def __call__(self, ori_w, output):
        out = {}
        num_pixels = ori_w.size
        n_cols = self.I.shape[0]
        # Importance weights are per-column; keep native dtypes (kernel upcasts).
        ow = ori_w.reshape(-1, n_cols)
        w_hat = output['W_hat'].reshape(ow.shape)

        col_d2 = jnp.sum(_distortion_column_sums(ow, w_hat), axis=0)   # (N,)
        sq_sum = jnp.sum(col_d2)
        wsq_sum = jnp.sum(col_d2 * self.I2)

        inv_n_std2 = 1.0 / (num_pixels * self.std ** 2)
        out['mse_loss'] = sq_sum * inv_n_std2
        out['importance_mse_loss'] = wsq_sum * inv_n_std2

        lik = output['likelihoods']
        tensors = list(lik.values()) if isinstance(lik, dict) else [lik]
        log_sum = sum(_log_sum_tensor(t) for t in tensors)
        out['bpp_loss'] = log_sum * (1.0 / (-math.log(2) * num_pixels))

        out['loss'] = self.lmbda * out['mse_loss'] + out['bpp_loss']
        return out


if __name__ == "__main__":
    # Small shapes; M deliberately NOT a multiple of 8 and one likelihood
    # tensor deliberately not a multiple of 128 elements, to exercise the
    # masked / native-2-D paths.
    M, N = 20, 128
    std = 1.5
    lmbda = 0.1

    key = jax.random.PRNGKey(0)
    k1, k2, k3, k4, k5 = jax.random.split(key, 5)

    Hr_diag = jax.random.uniform(k1, (N,), minval=0.1, maxval=2.0)
    Hr = jnp.diag(Hr_diag).astype(jnp.float32)           # only diag(Hr) is used
    ori_w = jax.random.normal(k2, (M, N), jnp.float32)
    W_hat_flat = (ori_w.reshape(-1)
                  + 0.05 * jax.random.normal(k3, (M * N,), jnp.float32))
    lik_y = jax.random.uniform(k4, (M, N), minval=0.01, maxval=1.0)    # -> (5,512) slab
    lik_z = jax.random.uniform(k5, (7, 100), minval=0.01, maxval=1.0)  # native 2-D fallback

    output = {'W_hat': W_hat_flat,
              'likelihoods': {'y': lik_y, 'z': lik_z}}

    loss_mod = RateDistortionLossPallas(std, Hr, lmbda)
    res = loss_mod(ori_w, output)
    jax.block_until_ready(res['loss'])

    # Pure-JAX reference check.
    d = ori_w - W_hat_flat.reshape(ori_w.shape)
    ref_mse = jnp.mean(d ** 2) / std ** 2
    ref_imp = jnp.mean((d * loss_mod.I) ** 2) / std ** 2
    ref_bpp = ((jnp.sum(jnp.log(lik_y)) + jnp.sum(jnp.log(lik_z)))
               / (-math.log(2) * ori_w.size))
    ref_loss = lmbda * ref_mse + ref_bpp
    assert jnp.allclose(res['mse_loss'], ref_mse, rtol=1e-5, atol=1e-6)
    assert jnp.allclose(res['importance_mse_loss'], ref_imp, rtol=1e-5, atol=1e-6)
    assert jnp.allclose(res['bpp_loss'], ref_bpp, rtol=1e-5, atol=1e-6)
    assert jnp.allclose(res['loss'], ref_loss, rtol=1e-5, atol=1e-6)

    # Extra checks that force the chunked (megacore) grid, ragged last blocks
    # and phantom-block clamping, which the tiny default shapes don't hit.
    w_hat2d = W_hat_flat.reshape(M, N)
    parts = _distortion_column_sums(ori_w, w_hat2d, block_rows=8)  # 3 blocks -> 2 chunks + phantom
    assert jnp.allclose(jnp.sum(parts, axis=0), jnp.sum(d * d, axis=0),
                        rtol=1e-5, atol=1e-5)

    lik_r = jax.random.uniform(jax.random.PRNGKey(7), (23, 256),
                               minval=0.01, maxval=1.0)
    ls = _log_sum_tensor(lik_r, block_rows=8)                      # ragged + phantom
    assert jnp.allclose(ls, jnp.sum(jnp.log(lik_r)), rtol=1e-5, atol=1e-4)

    # Mixed-dtype path (bf16 W_hat): 16-row sublane multiple + in-kernel upcast.
    w_hat_bf16 = w_hat2d.astype(jnp.bfloat16)
    parts_bf = _distortion_column_sums(ori_w, w_hat_bf16, block_rows=16)
    d_bf = ori_w - w_hat_bf16.astype(jnp.float32)
    assert jnp.allclose(jnp.sum(parts_bf, axis=0), jnp.sum(d_bf * d_bf, axis=0),
                        rtol=1e-4, atol=1e-4)

    print("KERNEL_OK")
</pallas_src>

<mosaic_0001>
module attributes {stable_mosaic.version = 11 : i64} {
  func.func @_rd_kernel(%arg0: i32, %arg1: i32, %arg2: memref<24x128xf32, #tpu.memory_space<vmem>>, %arg3: memref<24x128xf32, #tpu.memory_space<vmem>>, %arg4: memref<8x128xf32, #tpu.memory_space<vmem>>) attributes {dimension_semantics = [#tpu.dimension_semantics<parallel>, #tpu.dimension_semantics<arbitrary>], iteration_bounds = array<i64: 1, 1>, scalar_prefetch = 0 : i64, scratch_operands = 0 : i64, tpu.core_type = #tpu.core_type<tc>, window_params = [{transform_indices = @transform_0, window_bounds = array<i64: 24, 128>}, {transform_indices = @transform_1, window_bounds = array<i64: 24, 128>}, {transform_indices = @transform_2, window_bounds = array<i64: 8, 128>}]} {
    %c0_i32 = arith.constant 0 : i32
    %0 = arith.cmpi eq, %arg1, %c0_i32 : i32
    %1 = arith.extui %0 : i1 to i32
    %c0_i32_0 = arith.constant 0 : i32
    %2 = arith.cmpi ne, %1, %c0_i32_0 : i32
    scf.if %2 {
      %cst = arith.constant 0.000000e+00 : f32
      %17 = vector.broadcast %cst : f32 to vector<8x128xf32>
      %c0_7 = arith.constant 0 : index
      %c0_8 = arith.constant 0 : index
      %18 = vector.load %arg4[%c0_7, %c0_8] : memref<8x128xf32, #tpu.memory_space<vmem>>, vector<8x128xf32>
      tpu.vector_store %arg4[%c0_7, %c0_8], %17 {strides = array<i32>} : memref<8x128xf32, #tpu.memory_space<vmem>>, vector<8x128xf32>,
    } else {
    }
    %c0 = arith.constant 0 : index
    %c0_1 = arith.constant 0 : index
    %3 = vector.load %arg2[%c0, %c0_1] : memref<24x128xf32, #tpu.memory_space<vmem>>, vector<24x128xf32>
    %c0_2 = arith.constant 0 : index
    %c0_3 = arith.constant 0 : index
    %4 = vector.load %arg3[%c0_2, %c0_3] : memref<24x128xf32, #tpu.memory_space<vmem>>, vector<24x128xf32>
    %5 = arith.subf %3, %4 : vector<24x128xf32>
    %6 = arith.mulf %5, %5 : vector<24x128xf32>
    %c1_i32 = arith.constant 1 : i32
    %7 = arith.muli %arg0, %c1_i32 : i32
    %8 = arith.addi %7, %arg1 : i32
    %c24_i32 = arith.constant 24 : i32
    %9 = arith.muli %8, %c24_i32 : i32
    %c24_i32_4 = arith.constant 24 : i32
    %10 = arith.addi %9, %c24_i32_4 : i32
    %c20_i32 = arith.constant 20 : i32
    %11 = arith.cmpi sle, %10, %c20_i32 : i32
    %12 = arith.extui %11 : i1 to i32
    %c0_i32_5 = arith.constant 0 : i32
    %13 = arith.cmpi ne, %12, %c0_i32_5 : i32
    scf.if %13 {
      %c0_7 = arith.constant 0 : index
      %c0_8 = arith.constant 0 : index
      %17 = vector.load %arg4[%c0_7, %c0_8] : memref<8x128xf32, #tpu.memory_space<vmem>>, vector<8x128xf32>
      %18 = vector.shape_cast %6 : vector<24x128xf32> to vector<3x8x128xf32>
      %cst = arith.constant dense<0.000000e+00> : vector<8x128xf32>
      %19 = vector.multi_reduction <add>, %18, %cst [0] : vector<3x8x128xf32> to vector<8x128xf32>
      %20 = arith.addf %17, %19 : vector<8x128xf32>
      %c0_9 = arith.constant 0 : index
      %c0_10 = arith.constant 0 : index
      %21 = vector.load %arg4[%c0_9, %c0_10] : memref<8x128xf32, #tpu.memory_space<vmem>>, vector<8x128xf32>
      tpu.vector_store %arg4[%c0_9, %c0_10], %20 {strides = array<i32>} : memref<8x128xf32, #tpu.memory_space<vmem>>, vector<8x128xf32>,
    } else {
    }
    %true = arith.constant true
    %14 = arith.xori %11, %true : i1
    %15 = arith.extui %14 : i1 to i32
    %c0_i32_6 = arith.constant 0 : i32
    %16 = arith.cmpi ne, %15, %c0_i32_6 : i32
    scf.if %16 {
      %17 = tpu.iota {dimensions = array<i32: 0>} : vector<24x1xi32>
      %c20_i32_7 = arith.constant 20 : i32
      %18 = arith.subi %c20_i32_7, %9 : i32
      %19 = vector.broadcast %18 : i32 to vector<24x1xi32>
      %20 = arith.cmpi slt, %17, %19 : vector<24x1xi32>
      %cst = arith.constant 0.000000e+00 : f32
      %21 = vector.shape_cast %20 : vector<24x1xi1> to vector<24x1xi1>
      %22 = vector.broadcast %21 : vector<24x1xi1> to vector<24x128xi1>
      %23 = vector.broadcast %cst : f32 to vector<24x128xf32>
      %24 = arith.select %22, %6, %23 : vector<24x128xi1>, vector<24x128xf32>
      %c0_8 = arith.constant 0 : index
      %c0_9 = arith.constant 0 : index
      %25 = vector.load %arg4[%c0_8, %c0_9] : memref<8x128xf32, #tpu.memory_space<vmem>>, vector<8x128xf32>
      %26 = vector.shape_cast %24 : vector<24x128xf32> to vector<3x8x128xf32>
      %cst_10 = arith.constant dense<0.000000e+00> : vector<8x128xf32>
      %27 = vector.multi_reduction <add>, %26, %cst_10 [0] : vector<3x8x128xf32> to vector<8x128xf32>
      %28 = arith.addf %25, %27 : vector<8x128xf32>
      %c0_11 = arith.constant 0 : index
      %c0_12 = arith.constant 0 : index
      %29 = vector.load %arg4[%c0_11, %c0_12] : memref<8x128xf32, #tpu.memory_space<vmem>>, vector<8x128xf32>
      tpu.vector_store %arg4[%c0_11, %c0_12], %28 {strides = array<i32>} : memref<8x128xf32, #tpu.memory_space<vmem>>, vector<8x128xf32>,
    } else {
    }
    return
  }
  func.func @transform_0(%arg0: i32, %arg1: i32) -> (i32, i32) {
    %c1_i32 = arith.constant 1 : i32
    %0 = arith.muli %arg0, %c1_i32 : i32
    %1 = arith.addi %0, %arg1 : i32
    %c0_i32 = arith.constant 0 : i32
    %2 = arith.minsi %1, %c0_i32 : i32
    %c0_i32_0 = arith.constant 0 : i32
    %c0_i32_1 = arith.constant 0 : i32
    return %2, %c0_i32_0 : i32, i32
  }
  func.func @transform_1(%arg0: i32, %arg1: i32) -> (i32, i32) {
    %c1_i32 = arith.constant 1 : i32
    %0 = arith.muli %arg0, %c1_i32 : i32
    %1 = arith.addi %0, %arg1 : i32
    %c0_i32 = arith.constant 0 : i32
    %2 = arith.minsi %1, %c0_i32 : i32
    %c0_i32_0 = arith.constant 0 : i32
    %c0_i32_1 = arith.constant 0 : i32
    return %2, %c0_i32_0 : i32, i32
  }
  func.func @transform_2(%arg0: i32, %arg1: i32) -> (i32, i32) {
    %c0_i32 = arith.constant 0 : i32
    %c0_i32_0 = arith.constant 0 : i32
    return %arg0, %c0_i32 : i32, i32
  }
}

</mosaic_0001>

<llo_original>
// kernel: tpu_custom_call.1
$region0: #{tpu_custom_call.1}
  #allocation0 [shape = 'u32[]', space=smem, size = 0x4, offset = 0x4, fixed_abs, tag = 'smem constant byte address 0x4 - core index']
  #allocation1 [shape = 'u32[144,128]{1,0:T(1,128)}', space=vmem, size = 0x12000, scoped, tag = 'internal scratch']
  %s0 = inlined_call_operand.hbm [shape: f32[20,128], index: 0, kind: input, shape index: {}]
  %s1 = inlined_call_operand.hbm [shape: f32[20,128], index: 1, kind: input, shape index: {}]
  %s2 = inlined_call_operand.hbm [shape: f32[8,128], index: 2, kind: output, shape index: {}]
  %s3 = sld [smem:[#allocation0]]
  $region38: #{tpu_custom_call.1} parent=0
    _
  %s5 = ssub.s32 1, %s3
  %s6 = scalar_select 0, %s5, %s3
  $region1: #{tpu_custom_call.1} parent=0
    #allocation2 [shape = 'u8[12288]{0}', space=vmem, size = 0x3000, scoped, tag = 'input window, operand 0, single buffered']
    #allocation3 [shape = 's32[1]{0}', space=sflag, size = 0x4, scoped, tag = 'scoped memory for tpu_custom_call.1']
    #allocation4 [shape = 's32[1]{0}', space=sflag, size = 0x4, scoped, tag = 'scoped memory for tpu_custom_call.1']
    #allocation5 [shape = 'u8[12288]{0}', space=vmem, size = 0x3000, scoped, tag = 'input window, operand 1, single buffered']
    #allocation6 [shape = 's32[1]{0}', space=sflag, size = 0x4, scoped, tag = 'scoped memory for tpu_custom_call.1']
    #allocation7 [shape = 'u8[4096]{0}', space=vmem, size = 0x1000, scoped, tag = 'output window, operand 0, single buffered']
    %7 = vsyncpa [#allocation3], 0
    %8 = vsyncpa [#allocation6], 0
    %9 = vsyncpa [#allocation4], 0
    // Predicated region
    $region2: #{tpu_custom_call.1} parent=1 // pred_check
      _
    $region3: #{tpu_custom_call.1} parent=1 // pred_check_branch
      %11 = sbr.rel (0) target = $region5
    $region4: #{tpu_custom_call.1} parent=1 // pred_region
      %s12 = sadd.s32 0, 0
      %p13 = scmp.lt.s32.totalorder %s12, 0
      %s14 = scalar_select %p13, %s12, 0
      %s15 = smul.u32 3, %s14
      %s17 = ssub.s32 384, 384
      %18 = vsyncadd [#allocation3], %s17
      %s19 = smul.addr %s15, 128
      %s20 = scalar_lea.hbm %s0, %s19
      %s21 = sshll.u32 [#allocation2], 4
      %s22 = int_to_ptr.vmem [resolvable:$true] %s21
      %27 = dma.hbm_to_vmem [thread:$0]  %s20, 384, %s22, [#allocation3], 128, 128, 8
    $region5: #{tpu_custom_call.1} parent=1 // pred_fallthru
      _
    // Predicated region
    $region6: #{tpu_custom_call.1} parent=1 // pred_check
      _
    $region7: #{tpu_custom_call.1} parent=1 // pred_check_branch
      %29 = sbr.rel (0) target = $region9
    $region8: #{tpu_custom_call.1} parent=1 // pred_region
      %s30 = sadd.s32 0, 0
      %p31 = scmp.lt.s32.totalorder %s30, 0
      %s32 = scalar_select %p31, %s30, 0
      %s33 = smul.u32 3, %s32
      %s35 = ssub.s32 384, 384
      %36 = vsyncadd [#allocation6], %s35
      %s37 = smul.addr %s33, 128
      %s38 = scalar_lea.hbm %s1, %s37
      %s39 = sshll.u32 [#allocation5], 4
      %s40 = int_to_ptr.vmem [resolvable:$true] %s39
      %45 = dma.hbm_to_vmem [thread:$0]  %s38, 384, %s40, [#allocation6], 128, 128, 8
    $region9: #{tpu_custom_call.1} parent=1 // pred_fallthru
      _
    // Predicated region
    $region10: #{tpu_custom_call.1} parent=1 // pred_check
      _
    $region11: #{tpu_custom_call.1} parent=1 // pred_check_branch
      %47 = sbr.rel (0) target = $region13
    $region12: #{tpu_custom_call.1} parent=1 // pred_region
      %48 = dma.done [#allocation3], 384
    $region13: #{tpu_custom_call.1} parent=1 // pred_fallthru
      _
    // Predicated region
    $region14: #{tpu_custom_call.1} parent=1 // pred_check
      _
    $region15: #{tpu_custom_call.1} parent=1 // pred_check_branch
      %50 = sbr.rel (0) target = $region17
    $region16: #{tpu_custom_call.1} parent=1 // pred_region
      %51 = dma.done [#allocation6], 384
    $region17: #{tpu_custom_call.1} parent=1 // pred_fallthru
      _
    %s52 = sadd.s32 0, 0
    %p53 = scmp.lt.s32.totalorder %s52, 0
    %s54 = scalar_select %p53, %s52, 0
    %s55 = smul.u32 3, %s54
    %s56 = sadd.s32 0, 0
    %p57 = scmp.lt.s32.totalorder %s56, 0
    %s58 = scalar_select %p57, %s56, 0
    %s59 = smul.u32 3, %s58
    %p60 = scmp.eq.s32.totalorder 0, 0
    // Predicated region
    $region18: #{tpu_custom_call.1} parent=1 // pred_check
      %p61 = pneg %p60
    $region19: #{tpu_custom_call.1} parent=1 // pred_check_branch
      %63 = sbr.rel (%p61) target = $region21
    $region20: #{tpu_custom_call.1} parent=1 // pred_region
      %64 = vst [vmem:[#allocation7] sm:$0xff] 0.0
    $region21: #{tpu_custom_call.1} parent=1 // pred_fallthru
      _
    %v65 = vld [vmem:[#allocation2] sm:$0xff]
    %v66 = vld [vmem:[#allocation2 + $0x8] sm:$0xff]
    %v67 = vld [vmem:[#allocation2 + $0x10] sm:$0xff]
    %v68 = vld [vmem:[#allocation5] sm:$0xff]
    %v69 = vld [vmem:[#allocation5 + $0x8] sm:$0xff]
    %v70 = vld [vmem:[#allocation5 + $0x10] sm:$0xff]
    %v71 = vsub.f32 %v65, %v68
    %v72 = vsub.f32 %v66, %v69
    %v73 = vsub.f32 %v67, %v70
    %v74 = vmul.f32 %v71, %v71
    %v75 = vmul.f32 %v72, %v72
    %v76 = vmul.f32 %v73, %v73
    %s77 = sadd.s32 0, 0
    %s78 = smul.u32 %s77, 24
    %s79 = sadd.s32 %s78, 24
    %p80 = scmp.le.s32.totalorder %s79, 20
    // Predicated region
    $region22: #{tpu_custom_call.1} parent=1 // pred_check
      %p81 = pneg %p80
    $region23: #{tpu_custom_call.1} parent=1 // pred_check_branch
      %83 = sbr.rel (%p81) target = $region25
    $region24: #{tpu_custom_call.1} parent=1 // pred_region
      %v84 = vld [vmem:[#allocation7] sm:$0xff]
      %v85 = vadd.f32 %v74, %v75
      %v86 = vadd.f32 %v85, %v76
      %v87 = vadd.f32 %v84, %v86
      %88 = vst [vmem:[#allocation7] sm:$0xff] %v87
    $region25: #{tpu_custom_call.1} parent=1 // pred_fallthru
      _
    %p89 = scmp.gt.s32.totalorder %s79, 20
    // Predicated region
    $region26: #{tpu_custom_call.1} parent=1 // pred_check
      %p90 = pneg %p89
    $region27: #{tpu_custom_call.1} parent=1 // pred_check_branch
      %92 = sbr.rel (%p90) target = $region29
    $region28: #{tpu_custom_call.1} parent=1 // pred_region
      %v93 = vlaneseq
      %v94 = vshrl.u32 %v93, 7
      %v95 = vadd.s32 %v94, 8
      %v96 = vadd.s32 %v94, 16
      %s97 = ssub.s32 20, %s78
      %v98 = vstv %s97
      %vm99 = vcmp.lt.s32.totalorder %v94, %v98
      %vm100 = vcmp.lt.s32.totalorder %v95, %v98
      %vm101 = vcmp.lt.s32.totalorder %v96, %v98
      %v102 = vsel %vm99, 1, 0
      %v103 = vsel %vm100, 1, 0
      %v104 = vsel %vm101, 1, 0
      %vm105 = vcmp.eq.s32.totalorder %v102, 1
      %vm106 = vcmp.eq.s32.totalorder %v103, 1
      %vm107 = vcmp.eq.s32.totalorder %v104, 1
      %v108 = vsel %vm105, %v74, 0.0
      %v109 = vsel %vm106, %v75, 0.0
      %v110 = vsel %vm107, %v76, 0.0
      %v111 = vld [vmem:[#allocation7] sm:$0xff]
      %v112 = vadd.f32 %v108, %v109
      %v113 = vadd.f32 %v112, %v110
      %v114 = vadd.f32 %v111, %v113
      %115 = vst [vmem:[#allocation7] sm:$0xff] %v114
    $region29: #{tpu_custom_call.1} parent=1 // pred_fallthru
      _
    // Predicated region
    $region30: #{tpu_custom_call.1} parent=1 // pred_check
      _
    $region31: #{tpu_custom_call.1} parent=1 // pred_check_branch
      %117 = sbr.rel (0) target = $region33
    $region32: #{tpu_custom_call.1} parent=1 // pred_region
      %s119 = ssub.s32 128, 128
      %120 = vsyncadd [#allocation4], %s119
      %s122 = sshll.u32 [#allocation7], 4
      %s123 = int_to_ptr.vmem [resolvable:$true] %s122
      %125 = dma.vmem_to_hbm [thread:$0]  %s123, 128, %s2, [#allocation4]
    $region33: #{tpu_custom_call.1} parent=1 // pred_fallthru
      _
    // Predicated region
    $region34: #{tpu_custom_call.1} parent=1 // pred_check
      _
    $region35: #{tpu_custom_call.1} parent=1 // pred_check_branch
      %127 = sbr.rel (0) target = $region37
    $region36: #{tpu_custom_call.1} parent=1 // pred_region
      %128 = dma.done [#allocation4], 128
    $region37: #{tpu_custom_call.1} parent=1 // pred_fallthru
      _
    %129 = vsyncpa [#allocation3], 1
    %130 = vsyncpa [#allocation6], 1
    %131 = vsyncpa [#allocation4], 1

</llo_original>
